<compile_context>
chip_gen: v7x
topology: tpu7x:2x2x1
jax: 0.10.0
libtpu: 0.0.40
codegen_flags: <defaults>
</compile_context>

<pallas_src>
import functools

import jax
import jax.numpy as jnp
from jax import lax
from jax.experimental import pallas as pl
from jax.experimental.pallas import tpu as pltpu

_GUARD = 16       # zero guard rows at both ends of each padded scratch (>= pad)
_ROW_ALIGN = 16   # row alignment (bf16 packs 16 rows per vreg sublane group)


def _round_up(x, m):
    return ((x + m - 1) // m) * m


def _default_vmem_limit_bytes():
    """Generation-aware scoped-VMEM cap (v5e/v6e: 128 MiB phys, v7x: 64 MiB/TC)."""
    phys = None
    try:
        info = pltpu.get_tpu_info()
        phys = getattr(info, "vmem_capacity_bytes", None)
    except Exception:
        phys = None
    if not phys:
        phys = 64 * 1024 * 1024            # conservative fallback (v7x per-TC)
    return int(min(phys * 7 // 8, 112 * 1024 * 1024))


def _temporal_block_kernel(x_ref, w1_ref, b1_ref, w2_ref, b2_ref, out_ref,
                           x_pad, h_pad, *, ksize, pad, L, Lpp, NB, C, Cp,
                           compute_dtype, fuse_taps):
    # x_ref  : (NB, L, C)        unpadded activations for NB sequences (input dtype)
    # w*_ref : (ksize, Cp, Cp)   tap-major weights, compute_dtype
    # b*_ref : (1, Cp)           f32
    # out_ref: (NB, L, Cp)       lane-dense output
    # x_pad / h_pad : (NB*Lpp + 2*GUARD, Cp) compute_dtype scratch; sequence s occupies
    #   rows [GUARD + s*Lpp, GUARD + s*Lpp + L); every other row stays zero (conv pad).
    M = NB * Lpp

    def zero_rows(ref, off, n):
        if n > 0:
            ref[pl.ds(off, n), :] = jnp.zeros((n, Cp), compute_dtype)

    # Re-zero only rows that are never overwritten by data (guards + inter-sequence
    # pad rows). Done every step so the batch grid axis stays safely "parallel".
    zero_rows(x_pad, 0, _GUARD)
    zero_rows(x_pad, _GUARD + M, _GUARD)
    for s in range(NB):
        zero_rows(x_pad, _GUARD + s * Lpp + L, Lpp - L)
    zero_rows(h_pad, 0, _GUARD)
    zero_rows(h_pad, _GUARD + M, _GUARD)

    # Hoisted zero block for in-kernel lane padding (C -> Cp), reused by both loops.
    lane_zeros = jnp.zeros((L, Cp - C), x_ref.dtype) if Cp != C else None

    def widen(x_s):                       # (L, C) -> (L, Cp)
        if Cp == C:
            return x_s
        return jnp.concatenate([x_s, lane_zeros], axis=1)

    # Stage the NB sequences into the stacked, zero-padded layout (16-row-aligned
    # stores). NB is capped small, so static unrolling stays cheap.
    for s in range(NB):
        x_pad[pl.ds(_GUARD + s * Lpp, L), :] = widen(x_ref[s]).astype(compute_dtype)

    def conv(src_ref, w_ref, b_ref):
        if fuse_taps:
            # One MXU matmul with taps lane-concatenated along K (amortizes weight
            # pushes on the 256-deep v6e/v7x MXU, at the cost of materializing lhs).
            lhs = jnp.concatenate(
                [src_ref[pl.ds(_GUARD - pad + k, M), :] for k in range(ksize)], axis=1)
            acc = jnp.dot(lhs, w_ref[...].reshape(ksize * Cp, Cp),
                          preferred_element_type=jnp.float32)
        else:
            # Per-tap accumulation: no materialized im2col operand; K=Cp per push.
            acc = jnp.dot(src_ref[pl.ds(_GUARD - pad, M), :], w_ref[0],
                          preferred_element_type=jnp.float32)
            for k in range(1, ksize):
                acc += jnp.dot(src_ref[pl.ds(_GUARD - pad + k, M), :], w_ref[k],
                               preferred_element_type=jnp.float32)
        return acc + b_ref[...]

    # conv1 + bias + ReLU, masked so rows outside each sequence stay exactly zero
    # (those rows are the zero padding conv2 relies on).
    row = lax.broadcasted_iota(jnp.int32, (M, 1), 0)
    in_seq = (row % Lpp) < L
    h = jnp.where(in_seq, jnp.maximum(conv(x_pad, w1_ref, b1_ref), 0.0), 0.0)
    h_pad[pl.ds(_GUARD, M), :] = h.astype(compute_dtype)

    # conv2 + bias + ReLU.
    y = jnp.maximum(conv(h_pad, w2_ref, b2_ref), 0.0)

    # Residual add in f32 (exact module semantics); write only the L valid rows.
    for s in range(NB):
        res = widen(x_ref[s]).astype(jnp.float32)
        out_ref[s] = (res + y[s * Lpp:s * Lpp + L, :]).astype(out_ref.dtype)


def temporal_block_forward(x_ncl, w1, b1, w2, b2, ksize, *,
                           compute_dtype=jnp.bfloat16, nb=None, fuse_taps=False):
    """x_ncl: (N, C, L); w*: (C, C, K) PyTorch Conv1d layout; b*: (C,)."""
    N, C, L = x_ncl.shape
    assert ksize % 2 == 1, "only odd ksize matches PyTorch 'same' Conv1d length"
    pad = (ksize - 1) // 2
    assert pad <= _GUARD, "ksize up to 2*_GUARD+1 supported by the fixed guard size"

    Cp = max(128, _round_up(C, 128))            # lane-dense channels (weights/output)
    Lpp = _round_up(L + pad, _ROW_ALIGN)        # per-sequence slot stride (rows)

    if nb is None:
        # Target ~512 accumulator rows per step (feeds the MXU, amortizes ~0.35us/step
        # overhead), keep NB modest (unrolled staging loops), and keep the grid >= 2
        # so v7x's two TensorCores both get work along the "parallel" axis.
        nb = max(1, min(8, max(1, 512 // Lpp), N))
        if N >= 2:
            nb = max(1, min(nb, (N + 1) // 2))
    grid_n = -(-N // nb)
    N_pad = grid_n * nb
    M = nb * Lpp

    # ---- wrapper-side glue (layout only; channel padding of x happens in-kernel) ----
    x_nlc = jnp.transpose(x_ncl, (0, 2, 1))                     # (N, L, C)
    if N_pad != N:
        x_nlc = jnp.pad(x_nlc, ((0, N_pad - N), (0, 0), (0, 0)))

    def prep_w(w):
        wt = jnp.transpose(w, (2, 1, 0))                        # (K, C_in, C_out)
        wt = jnp.pad(wt, ((0, 0), (0, Cp - C), (0, Cp - C)))    # (K, Cp, Cp)
        return wt.astype(compute_dtype)

    def prep_b(b):
        return jnp.pad(b, (0, Cp - C)).reshape(1, Cp).astype(jnp.float32)

    w1f, w2f = prep_w(w1), prep_w(w2)
    b1f, b2f = prep_b(b1), prep_b(b2)

    kernel = functools.partial(
        _temporal_block_kernel, ksize=ksize, pad=pad, L=L, Lpp=Lpp, NB=nb, C=C, Cp=Cp,
        compute_dtype=compute_dtype, fuse_taps=fuse_taps)

    # Weights never re-DMA (constant index_map); once they are big enough to matter,
    # keep a single buffer so they don't double their VMEM footprint.
    w_kwargs = {"pipeline_mode": pl.Buffered(1)} if Cp >= 512 else {}

    # TODO(synk): for very long sequences (L*Cp too big for v7x's 64 MiB VMEM), add an
    # L-tile grid axis with a 2*pad halo (manual DMA or carried boundary rows).
    out_nlc = pl.pallas_call(
        kernel,
        out_shape=jax.ShapeDtypeStruct((N_pad, L, Cp), x_ncl.dtype),
        grid_spec=pltpu.PrefetchScalarGridSpec(
            num_scalar_prefetch=0,
            grid=(grid_n,),
            in_specs=[
                pl.BlockSpec((nb, L, C), lambda n: (n, 0, 0)),                    # x
                pl.BlockSpec((ksize, Cp, Cp), lambda n: (0, 0, 0), **w_kwargs),   # w1
                pl.BlockSpec((1, Cp), lambda n: (0, 0)),                          # b1
                pl.BlockSpec((ksize, Cp, Cp), lambda n: (0, 0, 0), **w_kwargs),   # w2
                pl.BlockSpec((1, Cp), lambda n: (0, 0)),                          # b2
            ],
            out_specs=pl.BlockSpec((nb, L, Cp), lambda n: (n, 0, 0)),
            scratch_shapes=[
                pltpu.VMEM((M + 2 * _GUARD, Cp), compute_dtype),   # padded x (stacked)
                pltpu.VMEM((M + 2 * _GUARD, Cp), compute_dtype),   # padded relu(conv1)
            ],
        ),
        compiler_params=pltpu.CompilerParams(
            dimension_semantics=("parallel",),
            vmem_limit_bytes=_default_vmem_limit_bytes(),
        ),
    )(x_nlc, w1f, b1f, w2f, b2f)

    # Drop padded sequences / channels and go back to NCL in one fused XLA copy.
    return jnp.transpose(out_nlc[:N, :, :C], (0, 2, 1))


def _reference_forward(x_ncl, w1, b1, w2, b2, ksize, q=lambda a: a):
    """Pure-JAX reference replicating nn.Conv1d semantics (NCL, zero pad).

    `q` optionally quantizes the conv operands (activations + weights), mirroring the
    kernel's bf16 MXU operands with f32 accumulation / bias / ReLU / residual.
    """
    pad = (ksize - 1) // 2

    def conv1d(z, w, b):
        y = jax.lax.conv_general_dilated(
            q(z), q(w), window_strides=(1,), padding=[(pad, pad)],
            dimension_numbers=("NCH", "OIH", "NCH"))
        return y + b[None, :, None]

    h = jax.nn.relu(conv1d(x_ncl, w1, b1))
    h = jax.nn.relu(conv1d(h, w2, b2))
    return x_ncl + h


if __name__ == "__main__":
    channels = 8
    ksize = 3
    N, L = 2, 16

    key = jax.random.PRNGKey(0)
    k_x, k_w1, k_b1, k_w2, k_b2 = jax.random.split(key, 5)

    bound = 1.0 / (channels * ksize) ** 0.5
    x = jax.random.normal(k_x, (N, channels, L), dtype=jnp.float32)
    w1 = jax.random.uniform(k_w1, (channels, channels, ksize), jnp.float32, -bound, bound)
    b1 = jax.random.uniform(k_b1, (channels,), jnp.float32, -bound, bound)
    w2 = jax.random.uniform(k_w2, (channels, channels, ksize), jnp.float32, -bound, bound)
    b2 = jax.random.uniform(k_b2, (channels,), jnp.float32, -bound, bound)

    out = jax.block_until_ready(temporal_block_forward(x, w1, b1, w2, b2, ksize))
    assert out.shape == (N, channels, L)

    # Check vs a reference with the same bf16 MXU-operand precision (tight tolerance)...
    q = lambda a: a.astype(jnp.bfloat16).astype(jnp.float32)
    ref_q = jax.block_until_ready(_reference_forward(x, w1, b1, w2, b2, ksize, q=q))
    assert jnp.allclose(out, ref_q, atol=1e-2, rtol=1e-2), "mismatch vs bf16-operand ref"

    # ...and vs the exact f32 module semantics (loose tolerance covers bf16 operands).
    ref_f32 = jax.block_until_ready(_reference_forward(x, w1, b1, w2, b2, ksize))
    assert jnp.allclose(out, ref_f32, atol=1e-1, rtol=1e-1), "mismatch vs f32 reference"

    print("KERNEL_OK")
</pallas_src>

<mosaic_0001>
module attributes {stable_mosaic.version = 11 : i64} {
  func.func @_temporal_block_kernel(%arg0: i32, %arg1: memref<1x16x8xf32, #tpu.memory_space<vmem>>, %arg2: memref<3x128x128xbf16, #tpu.memory_space<vmem>>, %arg3: memref<1x128xf32, #tpu.memory_space<vmem>>, %arg4: memref<3x128x128xbf16, #tpu.memory_space<vmem>>, %arg5: memref<1x128xf32, #tpu.memory_space<vmem>>, %arg6: memref<1x16x128xf32, #tpu.memory_space<vmem>>, %arg7: memref<64x128xbf16, #tpu.memory_space<vmem>>, %arg8: memref<64x128xbf16, #tpu.memory_space<vmem>>) attributes {dimension_semantics = [#tpu.dimension_semantics<parallel>], iteration_bounds = array<i64: 2>, scalar_prefetch = 0 : i64, scratch_operands = 2 : i64, tpu.core_type = #tpu.core_type<tc>, window_params = [{transform_indices = @transform_0, window_bounds = array<i64: 1, 16, 8>}, {pipeline_mode = #tpu.pipeline_mode<synchronous>, transform_indices = @transform_1, window_bounds = array<i64: 3, 128, 128>}, {pipeline_mode = #tpu.pipeline_mode<synchronous>, transform_indices = @transform_2, window_bounds = array<i64: 1, 128>}, {pipeline_mode = #tpu.pipeline_mode<synchronous>, transform_indices = @transform_3, window_bounds = array<i64: 3, 128, 128>}, {pipeline_mode = #tpu.pipeline_mode<synchronous>, transform_indices = @transform_4, window_bounds = array<i64: 1, 128>}, {transform_indices = @transform_5, window_bounds = array<i64: 1, 16, 128>}]} {
    %cst = arith.constant 0.000000e+00 : bf16
    %0 = vector.broadcast %cst : bf16 to vector<16x128xbf16>
    %c0 = arith.constant 0 : index
    %c0_0 = arith.constant 0 : index
    %1 = vector.load %arg7[%c0, %c0_0] : memref<64x128xbf16, #tpu.memory_space<vmem>>, vector<16x128xbf16>
    tpu.vector_store %arg7[%c0, %c0_0], %0 {strides = array<i32>} : memref<64x128xbf16, #tpu.memory_space<vmem>>, vector<16x128xbf16>,
    %cst_1 = arith.constant 0.000000e+00 : bf16
    %2 = vector.broadcast %cst_1 : bf16 to vector<16x128xbf16>
    %c48 = arith.constant 48 : index
    %c0_2 = arith.constant 0 : index
    %3 = vector.load %arg7[%c48, %c0_2] : memref<64x128xbf16, #tpu.memory_space<vmem>>, vector<16x128xbf16>
    tpu.vector_store %arg7[%c48, %c0_2], %2 {strides = array<i32>} : memref<64x128xbf16, #tpu.memory_space<vmem>>, vector<16x128xbf16>,
    %cst_3 = arith.constant 0.000000e+00 : bf16
    %4 = vector.broadcast %cst_3 : bf16 to vector<16x128xbf16>
    %c32 = arith.constant 32 : index
    %c0_4 = arith.constant 0 : index
    %5 = vector.load %arg7[%c32, %c0_4] : memref<64x128xbf16, #tpu.memory_space<vmem>>, vector<16x128xbf16>
    tpu.vector_store %arg7[%c32, %c0_4], %4 {strides = array<i32>} : memref<64x128xbf16, #tpu.memory_space<vmem>>, vector<16x128xbf16>,
    %cst_5 = arith.constant 0.000000e+00 : bf16
    %6 = vector.broadcast %cst_5 : bf16 to vector<16x128xbf16>
    %c0_6 = arith.constant 0 : index
    %c0_7 = arith.constant 0 : index
    %7 = vector.load %arg8[%c0_6, %c0_7] : memref<64x128xbf16, #tpu.memory_space<vmem>>, vector<16x128xbf16>
    tpu.vector_store %arg8[%c0_6, %c0_7], %6 {strides = array<i32>} : memref<64x128xbf16, #tpu.memory_space<vmem>>, vector<16x128xbf16>,
    %cst_8 = arith.constant 0.000000e+00 : bf16
    %8 = vector.broadcast %cst_8 : bf16 to vector<16x128xbf16>
    %c48_9 = arith.constant 48 : index
    %c0_10 = arith.constant 0 : index
    %9 = vector.load %arg8[%c48_9, %c0_10] : memref<64x128xbf16, #tpu.memory_space<vmem>>, vector<16x128xbf16>
    tpu.vector_store %arg8[%c48_9, %c0_10], %8 {strides = array<i32>} : memref<64x128xbf16, #tpu.memory_space<vmem>>, vector<16x128xbf16>,
    %cst_11 = arith.constant 0.000000e+00 : f32
    %10 = vector.broadcast %cst_11 : f32 to vector<16x120xf32>
    %c0_12 = arith.constant 0 : index
    %c0_13 = arith.constant 0 : index
    %c0_14 = arith.constant 0 : index
    %11 = vector.load %arg1[%c0_12, %c0_13, %c0_14] : memref<1x16x8xf32, #tpu.memory_space<vmem>>, vector<1x16x8xf32>
    %12 = vector.shape_cast %11 : vector<1x16x8xf32> to vector<16x8xf32>
    %13 = tpu.concatenate %12, %10 in 1 : vector<16x8xf32>, vector<16x120xf32> -> vector<16x128xf32>
    %14 = arith.truncf %13 : vector<16x128xf32> to vector<16x128xbf16>
    %c16 = arith.constant 16 : index
    %c0_15 = arith.constant 0 : index
    %15 = vector.load %arg7[%c16, %c0_15] : memref<64x128xbf16, #tpu.memory_space<vmem>>, vector<16x128xbf16>
    tpu.vector_store %arg7[%c16, %c0_15], %14 {strides = array<i32>} : memref<64x128xbf16, #tpu.memory_space<vmem>>, vector<16x128xbf16>,
    %16 = tpu.iota {dimensions = array<i32: 0>} : vector<32x1xi32>
    %c32_i32 = arith.constant 32 : i32
    %c0_i32 = arith.constant 0 : i32
    %17 = arith.cmpi eq, %c32_i32, %c0_i32 : i32
    %c1_i32 = arith.constant 1 : i32
    %18 = arith.select %17, %c1_i32, %c32_i32 : i32
    %19 = vector.broadcast %18 : i32 to vector<32x1xi32>
    %20 = arith.remsi %16, %19 : vector<32x1xi32>
    %c0_i32_16 = arith.constant 0 : i32
    %21 = vector.broadcast %c0_i32_16 : i32 to vector<32x1xi32>
    %22 = arith.cmpi ne, %20, %21 : vector<32x1xi32>
    %c0_i32_17 = arith.constant 0 : i32
    %23 = vector.broadcast %c0_i32_17 : i32 to vector<32x1xi32>
    %24 = arith.cmpi slt, %20, %23 : vector<32x1xi32>
    %c0_i32_18 = arith.constant 0 : i32
    %25 = arith.cmpi slt, %18, %c0_i32_18 : i32
    %26 = vector.broadcast %25 : i1 to vector<32x1xi1>
    %27 = vector.broadcast %26 : vector<32x1xi1> to vector<32x1xi1>
    %28 = arith.xori %24, %27 : vector<32x1xi1>
    %29 = arith.andi %28, %22 : vector<32x1xi1>
    %30 = vector.broadcast %18 : i32 to vector<32x1xi32>
    %31 = arith.addi %20, %30 : vector<32x1xi32>
    %32 = arith.select %29, %31, %20 : vector<32x1xi1>, vector<32x1xi32>
    %c16_i32 = arith.constant 16 : i32
    %33 = vector.broadcast %c16_i32 : i32 to vector<32x1xi32>
    %34 = arith.cmpi slt, %32, %33 : vector<32x1xi32>
    %c15 = arith.constant 15 : index
    %c0_19 = arith.constant 0 : index
    %35 = vector.load %arg7[%c15, %c0_19] : memref<64x128xbf16, #tpu.memory_space<vmem>>, vector<32x128xbf16>
    %c0_20 = arith.constant 0 : index
    %c0_21 = arith.constant 0 : index
    %c0_22 = arith.constant 0 : index
    %36 = vector.load %arg2[%c0_20, %c0_21, %c0_22] : memref<3x128x128xbf16, #tpu.memory_space<vmem>>, vector<1x128x128xbf16>
    %37 = vector.shape_cast %36 : vector<1x128x128xbf16> to vector<128x128xbf16>
    %cst_23 = arith.constant dense<0.000000e+00> : vector<32x128xf32>
    %38 = tpu.matmul %35, %37, %cst_23 {dimension_numbers = #tpu.dot_dimension_numbers<[1], [0], [0], [1], [0, 0, 1, 1], [], []>} : vector<32x128xbf16>, vector<128x128xbf16>, vector<32x128xf32> -> vector<32x128xf32>
    %c16_24 = arith.constant 16 : index
    %c0_25 = arith.constant 0 : index
    %39 = vector.load %arg7[%c16_24, %c0_25] : memref<64x128xbf16, #tpu.memory_space<vmem>>, vector<32x128xbf16>
    %c1 = arith.constant 1 : index
    %c0_26 = arith.constant 0 : index
    %c0_27 = arith.constant 0 : index
    %40 = vector.load %arg2[%c1, %c0_26, %c0_27] : memref<3x128x128xbf16, #tpu.memory_space<vmem>>, vector<1x128x128xbf16>
    %41 = vector.shape_cast %40 : vector<1x128x128xbf16> to vector<128x128xbf16>
    %cst_28 = arith.constant dense<0.000000e+00> : vector<32x128xf32>
    %42 = tpu.matmul %39, %41, %cst_28 {dimension_numbers = #tpu.dot_dimension_numbers<[1], [0], [0], [1], [0, 0, 1, 1], [], []>} : vector<32x128xbf16>, vector<128x128xbf16>, vector<32x128xf32> -> vector<32x128xf32>
    %43 = arith.addf %38, %42 : vector<32x128xf32>
    %c17 = arith.constant 17 : index
    %c0_29 = arith.constant 0 : index
    %44 = vector.load %arg7[%c17, %c0_29] : memref<64x128xbf16, #tpu.memory_space<vmem>>, vector<32x128xbf16>
    %c2 = arith.constant 2 : index
    %c0_30 = arith.constant 0 : index
    %c0_31 = arith.constant 0 : index
    %45 = vector.load %arg2[%c2, %c0_30, %c0_31] : memref<3x128x128xbf16, #tpu.memory_space<vmem>>, vector<1x128x128xbf16>
    %46 = vector.shape_cast %45 : vector<1x128x128xbf16> to vector<128x128xbf16>
    %cst_32 = arith.constant dense<0.000000e+00> : vector<32x128xf32>
    %47 = tpu.matmul %44, %46, %cst_32 {dimension_numbers = #tpu.dot_dimension_numbers<[1], [0], [0], [1], [0, 0, 1, 1], [], []>} : vector<32x128xbf16>, vector<128x128xbf16>, vector<32x128xf32> -> vector<32x128xf32>
    %48 = arith.addf %43, %47 : vector<32x128xf32>
    %c0_33 = arith.constant 0 : index
    %c0_34 = arith.constant 0 : index
    %49 = vector.load %arg3[%c0_33, %c0_34] : memref<1x128xf32, #tpu.memory_space<vmem>>, vector<1x128xf32>
    %50 = vector.broadcast %49 : vector<1x128xf32> to vector<32x128xf32>
    %51 = arith.addf %48, %50 : vector<32x128xf32>
    %cst_35 = arith.constant 0.000000e+00 : f32
    %52 = vector.broadcast %cst_35 : f32 to vector<32x128xf32>
    %53 = arith.maximumf %51, %52 : vector<32x128xf32>
    %cst_36 = arith.constant 0.000000e+00 : f32
    %54 = vector.shape_cast %34 : vector<32x1xi1> to vector<32x1xi1>
    %55 = vector.broadcast %54 : vector<32x1xi1> to vector<32x128xi1>
    %56 = vector.broadcast %cst_36 : f32 to vector<32x128xf32>
    %57 = arith.select %55, %53, %56 : vector<32x128xi1>, vector<32x128xf32>
    %58 = arith.truncf %57 : vector<32x128xf32> to vector<32x128xbf16>
    %c16_37 = arith.constant 16 : index
    %c0_38 = arith.constant 0 : index
    %59 = vector.load %arg8[%c16_37, %c0_38] : memref<64x128xbf16, #tpu.memory_space<vmem>>, vector<32x128xbf16>
    tpu.vector_store %arg8[%c16_37, %c0_38], %58 {strides = array<i32>} : memref<64x128xbf16, #tpu.memory_space<vmem>>, vector<32x128xbf16>,
    %c15_39 = arith.constant 15 : index
    %c0_40 = arith.constant 0 : index
    %60 = vector.load %arg8[%c15_39, %c0_40] : memref<64x128xbf16, #tpu.memory_space<vmem>>, vector<32x128xbf16>
    %c0_41 = arith.constant 0 : index
    %c0_42 = arith.constant 0 : index
    %c0_43 = arith.constant 0 : index
    %61 = vector.load %arg4[%c0_41, %c0_42, %c0_43] : memref<3x128x128xbf16, #tpu.memory_space<vmem>>, vector<1x128x128xbf16>
    %62 = vector.shape_cast %61 : vector<1x128x128xbf16> to vector<128x128xbf16>
    %cst_44 = arith.constant dense<0.000000e+00> : vector<32x128xf32>
    %63 = tpu.matmul %60, %62, %cst_44 {dimension_numbers = #tpu.dot_dimension_numbers<[1], [0], [0], [1], [0, 0, 1, 1], [], []>} : vector<32x128xbf16>, vector<128x128xbf16>, vector<32x128xf32> -> vector<32x128xf32>
    %c16_45 = arith.constant 16 : index
    %c0_46 = arith.constant 0 : index
    %64 = vector.load %arg8[%c16_45, %c0_46] : memref<64x128xbf16, #tpu.memory_space<vmem>>, vector<32x128xbf16>
    %c1_47 = arith.constant 1 : index
    %c0_48 = arith.constant 0 : index
    %c0_49 = arith.constant 0 : index
    %65 = vector.load %arg4[%c1_47, %c0_48, %c0_49] : memref<3x128x128xbf16, #tpu.memory_space<vmem>>, vector<1x128x128xbf16>
    %66 = vector.shape_cast %65 : vector<1x128x128xbf16> to vector<128x128xbf16>
    %cst_50 = arith.constant dense<0.000000e+00> : vector<32x128xf32>
    %67 = tpu.matmul %64, %66, %cst_50 {dimension_numbers = #tpu.dot_dimension_numbers<[1], [0], [0], [1], [0, 0, 1, 1], [], []>} : vector<32x128xbf16>, vector<128x128xbf16>, vector<32x128xf32> -> vector<32x128xf32>
    %68 = arith.addf %63, %67 : vector<32x128xf32>
    %c17_51 = arith.constant 17 : index
    %c0_52 = arith.constant 0 : index
    %69 = vector.load %arg8[%c17_51, %c0_52] : memref<64x128xbf16, #tpu.memory_space<vmem>>, vector<32x128xbf16>
    %c2_53 = arith.constant 2 : index
    %c0_54 = arith.constant 0 : index
    %c0_55 = arith.constant 0 : index
    %70 = vector.load %arg4[%c2_53, %c0_54, %c0_55] : memref<3x128x128xbf16, #tpu.memory_space<vmem>>, vector<1x128x128xbf16>
    %71 = vector.shape_cast %70 : vector<1x128x128xbf16> to vector<128x128xbf16>
    %cst_56 = arith.constant dense<0.000000e+00> : vector<32x128xf32>
    %72 = tpu.matmul %69, %71, %cst_56 {dimension_numbers = #tpu.dot_dimension_numbers<[1], [0], [0], [1], [0, 0, 1, 1], [], []>} : vector<32x128xbf16>, vector<128x128xbf16>, vector<32x128xf32> -> vector<32x128xf32>
    %73 = arith.addf %68, %72 : vector<32x128xf32>
    %c0_57 = arith.constant 0 : index
    %c0_58 = arith.constant 0 : index
    %74 = vector.load %arg5[%c0_57, %c0_58] : memref<1x128xf32, #tpu.memory_space<vmem>>, vector<1x128xf32>
    %75 = vector.broadcast %74 : vector<1x128xf32> to vector<32x128xf32>
    %76 = arith.addf %73, %75 : vector<32x128xf32>
    %cst_59 = arith.constant 0.000000e+00 : f32
    %77 = vector.broadcast %cst_59 : f32 to vector<32x128xf32>
    %78 = arith.maximumf %76, %77 : vector<32x128xf32>
    %c0_60 = arith.constant 0 : index
    %c0_61 = arith.constant 0 : index
    %c0_62 = arith.constant 0 : index
    %79 = vector.load %arg1[%c0_60, %c0_61, %c0_62] : memref<1x16x8xf32, #tpu.memory_space<vmem>>, vector<1x16x8xf32>
    %80 = vector.shape_cast %79 : vector<1x16x8xf32> to vector<16x8xf32>
    %81 = tpu.concatenate %80, %10 in 1 : vector<16x8xf32>, vector<16x120xf32> -> vector<16x128xf32>
    %82 = vector.extract_strided_slice %78 {offsets = [0, 0], sizes = [16, 128], strides = [1, 1]} : vector<32x128xf32> to vector<16x128xf32>
    %83 = arith.addf %81, %82 : vector<16x128xf32>
    %c0_63 = arith.constant 0 : index
    %c0_64 = arith.constant 0 : index
    %c0_65 = arith.constant 0 : index
    %84 = vector.load %arg6[%c0_63, %c0_64, %c0_65] : memref<1x16x128xf32, #tpu.memory_space<vmem>>, vector<1x16x128xf32>
    %85 = vector.shape_cast %84 : vector<1x16x128xf32> to vector<16x128xf32>
    %86 = vector.shape_cast %83 : vector<16x128xf32> to vector<1x16x128xf32>
    tpu.vector_store %arg6[%c0_63, %c0_64, %c0_65], %86 {strides = array<i32>} : memref<1x16x128xf32, #tpu.memory_space<vmem>>, vector<1x16x128xf32>,
    return
  }
  func.func @transform_0(%arg0: i32) -> (i32, i32, i32) {
    %c0_i32 = arith.constant 0 : i32
    %c0_i32_0 = arith.constant 0 : i32
    %c0_i32_1 = arith.constant 0 : i32
    return %arg0, %c0_i32, %c0_i32_0 : i32, i32, i32
  }
  func.func @transform_1(%arg0: i32) -> (i32, i32, i32) {
    %c0_i32 = arith.constant 0 : i32
    %c0_i32_0 = arith.constant 0 : i32
    %c0_i32_1 = arith.constant 0 : i32
    %c0_i32_2 = arith.constant 0 : i32
    return %c0_i32, %c0_i32_0, %c0_i32_1 : i32, i32, i32
  }
  func.func @transform_2(%arg0: i32) -> (i32, i32) {
    %c0_i32 = arith.constant 0 : i32
    %c0_i32_0 = arith.constant 0 : i32
    %c0_i32_1 = arith.constant 0 : i32
    return %c0_i32, %c0_i32_0 : i32, i32
  }
  func.func @transform_3(%arg0: i32) -> (i32, i32, i32) {
    %c0_i32 = arith.constant 0 : i32
    %c0_i32_0 = arith.constant 0 : i32
    %c0_i32_1 = arith.constant 0 : i32
    %c0_i32_2 = arith.constant 0 : i32
    return %c0_i32, %c0_i32_0, %c0_i32_1 : i32, i32, i32
  }
  func.func @transform_4(%arg0: i32) -> (i32, i32) {
    %c0_i32 = arith.constant 0 : i32
    %c0_i32_0 = arith.constant 0 : i32
    %c0_i32_1 = arith.constant 0 : i32
    return %c0_i32, %c0_i32_0 : i32, i32
  }
  func.func @transform_5(%arg0: i32) -> (i32, i32, i32) {
    %c0_i32 = arith.constant 0 : i32
    %c0_i32_0 = arith.constant 0 : i32
    %c0_i32_1 = arith.constant 0 : i32
    return %arg0, %c0_i32, %c0_i32_0 : i32, i32, i32
  }
}

</mosaic_0001>

<llo_original>
// kernel: tpu_custom_call.1
$region0: #{tpu_custom_call.1}
  #allocation0 [shape = 'u32[]', space=smem, size = 0x4, offset = 0x4, fixed_abs, tag = 'smem constant byte address 0x4 - core index']
  #allocation1 [shape = 'u32[144,128]{1,0:T(1,128)}', space=vmem, size = 0x12000, scoped, tag = 'internal scratch']
  #allocation2 [shape = 'bf16[64,128]{1,0:T(16,128)(2,1)}', space=vmem, size = 0x4000, scoped, tag = 'scratch operand']
  #allocation3 [shape = 'bf16[64,128]{1,0:T(16,128)(2,1)}', space=vmem, size = 0x4000, scoped, tag = 'scratch operand']
  %s0 = inlined_call_operand.vmem [shape: f32[2,16,8], index: 0, kind: input, shape index: {}]
  %s1 = inlined_call_operand.hbm [shape: bf16[3,128,128], index: 1, kind: input, shape index: {}]
  %s2 = inlined_call_operand.vmem [shape: f32[1,128], index: 2, kind: input, shape index: {}]
  %s3 = inlined_call_operand.hbm [shape: bf16[3,128,128], index: 3, kind: input, shape index: {}]
  %s4 = inlined_call_operand.vmem [shape: f32[1,128], index: 4, kind: input, shape index: {}]
  %s5 = inlined_call_operand.hbm [shape: f32[2,16,128], index: 5, kind: output, shape index: {}]
  %s6 = sld [smem:[#allocation0]]
  $region61: #{tpu_custom_call.1} parent=0
    _
  %s8 = ssub.s32 1, %s6
  %s9 = scalar_select 0, %s8, %s6
  $region1: #{tpu_custom_call.1} parent=0
    #allocation4 [shape = 'u8[98304]{0}', space=vmem, size = 0x18000, scoped, tag = 'input window, operand 1, single buffered']
    #allocation5 [shape = 's32[2]{0}', space=sflag, size = 0x8, scoped, tag = 'scoped memory for tpu_custom_call.1']
    #allocation6 [shape = 's32[2]{0}', space=sflag, size = 0x8, scoped, tag = 'scoped memory for tpu_custom_call.1']
    #allocation7 [shape = 'u8[98304]{0}', space=vmem, size = 0x18000, scoped, tag = 'input window, operand 3, single buffered']
    #allocation8 [shape = 's32[1]{0}', space=sflag, size = 0x4, scoped, tag = 'scoped memory for tpu_custom_call.1']
    #allocation9 [shape = 'u8[16384]{0}', space=vmem, size = 0x4000, scoped, tag = 'output window, operand 0']
    %10 = vsyncpa [#allocation5], 0
    %11 = vsyncpa [#allocation8], 0
    %12 = vsyncpa [#allocation6], 0
    %s13 = scalar_lea.sflag [#allocation6], 1
    %14 = vsyncpa %s13, 0
    loop: start=0, step=1, limit=4
    $region2: #{tpu_custom_call.1} parent=1 // loop_pre_header
      _
    $region3: #{tpu_custom_call.1} parent=1 // loop_header
      %s16 = sphi 0, %s20
      %p17 = scmp.ge.s32.totalorder %s16, 4
      %s26 = sphi 0, %s28
      %s29 = sphi 0, %s26
      %s30 = sphi 0, %s29
      %s46 = sphi 0, %s30
      %s50 = sphi 0, %s50
      %s52 = sphi 0, %s50
      %s53 = sphi 0, %s52
      %s67 = sphi 0, %s53
      %s71 = sphi 0, %s71
      %s73 = sphi 0, %s71
      %s74 = sphi 0, %s73
      %s88 = sphi 0, %s74
      %s92 = sphi 0, %s92
      %s94 = sphi 0, %s92
      %s95 = sphi 0, %s94
      %s109 = sphi 0, %s95
      %s113 = sphi 0, %s113
      %s115 = sphi 0, %s113
      %s116 = sphi 0, %s115
      %s130 = sphi 0, %s116
      %s136 = sphi 0, %s138
      %s139 = sphi 0, %s136
      %s140 = sphi 0, %s139
      %s156 = sphi 0, %s140
    $region4: #{tpu_custom_call.1} parent=1 // loop_header_branch
      %19 = sbr.rel (%p17) target = $region8
    $region5: #{tpu_custom_call.1} parent=1 // loop_body
      %s21 = ssub.s32 %s16, 1
      %s22 = ssub.s32 %s16, 2
      %s23 = sadd.s32 %s16, 1
      %s24 = ssub.s32 %s16, %s23
      %p25 = scmp.eq.s32.totalorder %s24, 0
      %s27 = sadd.s32 %s26, 1
      %s28 = scalar_select %p25, %s26, %s27
      %p31 = pneg %p25
      %p32 = scmp.eq.s32.totalorder %s16, 1
      %p33 = por %p31, %p32
      %p34 = scmp.ne.s32.totalorder %s26, %s29
      %p35 = scmp.eq.s32.totalorder %s16, 0
      %p36 = por %p34, %p35
      %p37 = scmp.ne.s32.totalorder %s26, %s29
      %p38 = scmp.eq.s32.totalorder %s21, 1
      %p39 = por %p37, %p38
      %p40 = scmp.ne.s32.totalorder %s29, %s30
      %p41 = scmp.eq.s32.totalorder %s21, 0
      %p42 = por %p40, %p41
      %p43 = scmp.ne.s32.totalorder %s29, %s30
      %p44 = scmp.eq.s32.totalorder %s22, 1
      %p45 = por %p43, %p44
      %p47 = scmp.ne.s32.totalorder %s30, %s46
      %p48 = scmp.eq.s32.totalorder %s22, 0
      %p49 = por %p47, %p48
      %s51 = sadd.s32 %s50, 1
      %p54 = scmp.eq.s32.totalorder %s16, 1
      %p55 = scmp.ne.s32.totalorder %s50, %s52
      %p56 = scmp.eq.s32.totalorder %s16, 0
      %p57 = por %p55, %p56
      %p58 = scmp.ne.s32.totalorder %s50, %s52
      %p59 = scmp.eq.s32.totalorder %s21, 1
      %p60 = por %p58, %p59
      %p61 = scmp.ne.s32.totalorder %s52, %s53
      %p62 = scmp.eq.s32.totalorder %s21, 0
      %p63 = por %p61, %p62
      %p64 = scmp.ne.s32.totalorder %s52, %s53
      %p65 = scmp.eq.s32.totalorder %s22, 1
      %p66 = por %p64, %p65
      %p68 = scmp.ne.s32.totalorder %s53, %s67
      %p69 = scmp.eq.s32.totalorder %s22, 0
      %p70 = por %p68, %p69
      %s72 = sadd.s32 %s71, 1
      %p75 = scmp.eq.s32.totalorder %s16, 1
      %p76 = scmp.ne.s32.totalorder %s71, %s73
      %p77 = scmp.eq.s32.totalorder %s16, 0
      %p78 = por %p76, %p77
      %p79 = scmp.ne.s32.totalorder %s71, %s73
      %p80 = scmp.eq.s32.totalorder %s21, 1
      %p81 = por %p79, %p80
      %p82 = scmp.ne.s32.totalorder %s73, %s74
      %p83 = scmp.eq.s32.totalorder %s21, 0
      %p84 = por %p82, %p83
      %p85 = scmp.ne.s32.totalorder %s73, %s74
      %p86 = scmp.eq.s32.totalorder %s22, 1
      %p87 = por %p85, %p86
      %p89 = scmp.ne.s32.totalorder %s74, %s88
      %p90 = scmp.eq.s32.totalorder %s22, 0
      %p91 = por %p89, %p90
      %s93 = sadd.s32 %s92, 1
      %p96 = scmp.eq.s32.totalorder %s16, 1
      %p97 = scmp.ne.s32.totalorder %s92, %s94
      %p98 = scmp.eq.s32.totalorder %s16, 0
      %p99 = por %p97, %p98
      %p100 = scmp.ne.s32.totalorder %s92, %s94
      %p101 = scmp.eq.s32.totalorder %s21, 1
      %p102 = por %p100, %p101
      %p103 = scmp.ne.s32.totalorder %s94, %s95
      %p104 = scmp.eq.s32.totalorder %s21, 0
      %p105 = por %p103, %p104
      %p106 = scmp.ne.s32.totalorder %s94, %s95
      %p107 = scmp.eq.s32.totalorder %s22, 1
      %p108 = por %p106, %p107
      %p110 = scmp.ne.s32.totalorder %s95, %s109
      %p111 = scmp.eq.s32.totalorder %s22, 0
      %p112 = por %p110, %p111
      %s114 = sadd.s32 %s113, 1
      %p117 = scmp.eq.s32.totalorder %s16, 1
      %p118 = scmp.ne.s32.totalorder %s113, %s115
      %p119 = scmp.eq.s32.totalorder %s16, 0
      %p120 = por %p118, %p119
      %p121 = scmp.ne.s32.totalorder %s113, %s115
      %p122 = scmp.eq.s32.totalorder %s21, 1
      %p123 = por %p121, %p122
      %p124 = scmp.ne.s32.totalorder %s115, %s116
      %p125 = scmp.eq.s32.totalorder %s21, 0
      %p126 = por %p124, %p125
      %p127 = scmp.ne.s32.totalorder %s115, %s116
      %p128 = scmp.eq.s32.totalorder %s22, 1
      %p129 = por %p127, %p128
      %p131 = scmp.ne.s32.totalorder %s116, %s130
      %p132 = scmp.eq.s32.totalorder %s22, 0
      %p133 = por %p131, %p132
      %s134 = ssub.s32 %s16, %s23
      %p135 = scmp.eq.s32.totalorder %s134, 0
      %s137 = sadd.s32 %s136, 1
      %s138 = scalar_select %p135, %s136, %s137
      %p141 = pneg %p135
      %p142 = scmp.eq.s32.totalorder %s16, 1
      %p143 = por %p141, %p142
      %p144 = scmp.ne.s32.totalorder %s136, %s139
      %p145 = scmp.eq.s32.totalorder %s16, 0
      %p146 = por %p144, %p145
      %p147 = scmp.ne.s32.totalorder %s136, %s139
      %p148 = scmp.eq.s32.totalorder %s21, 1
      %p149 = por %p147, %p148
      %p150 = scmp.ne.s32.totalorder %s139, %s140
      %p151 = scmp.eq.s32.totalorder %s21, 0
      %p152 = por %p150, %p151
      %p153 = scmp.ne.s32.totalorder %s139, %s140
      %p154 = scmp.eq.s32.totalorder %s22, 1
      %p155 = por %p153, %p154
      %p157 = scmp.ne.s32.totalorder %s140, %s156
      %p158 = scmp.eq.s32.totalorder %s22, 0
      %p159 = por %p157, %p158
      %p160 = scmp.le.s32.totalorder 1, %s16
      %p161 = scmp.lt.s32.totalorder %s16, 3
      %p162 = pnand %p160, %p161
      %p163 = pneg %p162
      // Predicated region
      $region9: #{tpu_custom_call.1} parent=5 // pred_check
        _
      $region10: #{tpu_custom_call.1} parent=5 // pred_check_branch
        %165 = sbr.rel (%p162) target = $region12
      $region11: #{tpu_custom_call.1} parent=5 // pred_region
        %s166 = ssub.s32 %s16, 1
        // Predicated region
        $region13: #{tpu_custom_call.1} parent=11 // pred_check
          %p167 = pneg %p63
        $region14: #{tpu_custom_call.1} parent=11 // pred_check_branch
          %169 = sbr.rel (%p167) target = $region16
        $region15: #{tpu_custom_call.1} parent=11 // pred_region
          %s171 = ssub.s32 3072, 3072
          %172 = vsyncadd [#allocation5], %s171
          %s173 = sshll.u32 [#allocation4], 4
          %s174 = int_to_ptr.vmem [resolvable:$true] %s173
          %179 = dma.hbm_to_vmem [thread:$0]  %s1, 3072, %s174, [#allocation5], 64, 64, 4
        $region16: #{tpu_custom_call.1} parent=11 // pred_fallthru
          _
        // Predicated region
        $region17: #{tpu_custom_call.1} parent=11 // pred_check
          %p180 = pneg %p84
        $region18: #{tpu_custom_call.1} parent=11 // pred_check_branch
          %182 = sbr.rel (%p180) target = $region20
        $region19: #{tpu_custom_call.1} parent=11 // pred_region
          _
        $region20: #{tpu_custom_call.1} parent=11 // pred_fallthru
          _
        // Predicated region
        $region21: #{tpu_custom_call.1} parent=11 // pred_check
          %p183 = pneg %p105
        $region22: #{tpu_custom_call.1} parent=11 // pred_check_branch
          %185 = sbr.rel (%p183) target = $region24
        $region23: #{tpu_custom_call.1} parent=11 // pred_region
          %s187 = ssub.s32 3072, 3072
          %188 = vsyncadd [#allocation8], %s187
          %s189 = sshll.u32 [#allocation7], 4
          %s190 = int_to_ptr.vmem [resolvable:$true] %s189
          %195 = dma.hbm_to_vmem [thread:$0]  %s3, 3072, %s190, [#allocation8], 64, 64, 4
        $region24: #{tpu_custom_call.1} parent=11 // pred_fallthru
          _
        // Predicated region
        $region25: #{tpu_custom_call.1} parent=11 // pred_check
          %p196 = pneg %p126
        $region26: #{tpu_custom_call.1} parent=11 // pred_check_branch
          %198 = sbr.rel (%p196) target = $region28
        $region27: #{tpu_custom_call.1} parent=11 // pred_region
          _
        $region28: #{tpu_custom_call.1} parent=11 // pred_fallthru
          _
      $region12: #{tpu_custom_call.1} parent=5 // pred_fallthru
        _
      %p199 = scmp.lt.s32.totalorder %s16, 2
      // Predicated region
      $region29: #{tpu_custom_call.1} parent=5 // pred_check
        %p200 = pneg %p199
      $region30: #{tpu_custom_call.1} parent=5 // pred_check_branch
        %202 = sbr.rel (%p200) target = $region32
      $region31: #{tpu_custom_call.1} parent=5 // pred_region
        // Predicated region
        $region33: #{tpu_custom_call.1} parent=31 // pred_check
          %p203 = pneg %p36
        $region34: #{tpu_custom_call.1} parent=31 // pred_check_branch
          %205 = sbr.rel (%p203) target = $region36
        $region35: #{tpu_custom_call.1} parent=31 // pred_region
          %p206 = scmp.lt.s32.totalorder %s16, 1
          %s207 = scalar_select %p206, %s16, 1
          %s208 = smul.addr %s207, 2
          %s209 = smul.addr %s208, 8
          %s210 = scalar_lea.vmem %s0, %s209
        $region36: #{tpu_custom_call.1} parent=31 // pred_fallthru
          _
      $region32: #{tpu_custom_call.1} parent=5 // pred_fallthru
        _
      %p211 = scmp.le.s32.totalorder 1, %s16
      %p212 = scmp.lt.s32.totalorder %s16, 3
      %p213 = pnand %p211, %p212
      %p214 = pneg %p213
      // Predicated region
      $region37: #{tpu_custom_call.1} parent=5 // pred_check
        _
      $region38: #{tpu_custom_call.1} parent=5 // pred_check_branch
        %216 = sbr.rel (%p213) target = $region40
      $region39: #{tpu_custom_call.1} parent=5 // pred_region
        %s217 = ssub.s32 %s16, 1
        // Predicated region
        $region41: #{tpu_custom_call.1} parent=39 // pred_check
          %p218 = pneg %p63
        $region42: #{tpu_custom_call.1} parent=39 // pred_check_branch
          %220 = sbr.rel (%p218) target = $region44
        $region43: #{tpu_custom_call.1} parent=39 // pred_region
          %221 = dma.done [#allocation5], 3072
        $region44: #{tpu_custom_call.1} parent=39 // pred_fallthru
          _
        // Predicated region
        $region45: #{tpu_custom_call.1} parent=39 // pred_check
          %p222 = pneg %p105
        $region46: #{tpu_custom_call.1} parent=39 // pred_check_branch
          %224 = sbr.rel (%p222) target = $region48
        $region47: #{tpu_custom_call.1} parent=39 // pred_region
          %225 = dma.done [#allocation8], 3072
        $region48: #{tpu_custom_call.1} parent=39 // pred_fallthru
          _
        %p226 = scmp.lt.s32.totalorder %s21, 1
        %s227 = scalar_select %p226, %s21, 1
        %s228 = smul.addr %s227, 2
        %s229 = smul.addr %s228, 8
        %s230 = scalar_lea.vmem %s0, %s229
        %p231 = pneg %p42
        %p232 = pneg %p39
        %p233 = pneg %p63
        %p234 = pneg %p60
        %p235 = pneg %p84
        %p236 = pneg %p81
        %p237 = pneg %p105
        %p238 = pneg %p102
        %p239 = pneg %p126
        %p240 = pneg %p123
        %p241 = pneg %p152
        %p242 = pneg %p149
        %s243 = sand.u32 %s139, 1
        %s244 = scalar_lea.sflag [#allocation6], %s243
        %s245 = sand.u32 %s139, 1
        %s246 = smul.addr %s245, 16
        %s247 = scalar_lea.vmem [#allocation9], %s246
        %p248 = scmp.lt.s32.totalorder %s21, 1
        %s249 = scalar_select %p248, %s21, 1
        %s250 = smul.addr %s249, 2
        %s251 = smul.addr %s250, 8
        %s252 = scalar_lea.vmem %s0, %s251
        %254 = vst [vmem:[#allocation2] sm:$0xff] 0
        %255 = vst [vmem:[#allocation2 + $0x18] sm:$0xff] 0
        %256 = vst [vmem:[#allocation2 + $0x10] sm:$0xff] 0
        %257 = vst [vmem:[#allocation3] sm:$0xff] 0
        %258 = vst [vmem:[#allocation3 + $0x18] sm:$0xff] 0
        %v259 = vld [vmem:[%s252] sm:$0xff]
        %v260 = vld [vmem:[%s252 + $0x8] sm:$0xff]
        %vm261 = vcmask 64512
        %v262 = vsel %vm261, %v259, 0.0
        %v263 = vsel %vm261, %v260, 0.0
        %v264 = vpack.c.bf16 %v263, %v262
        %265 = vst [vmem:[#allocation2 + $0x8] sm:$0xff] %v264
        %v266 = vlaneseq
        %v267 = vshrl.u32 %v266, 7
        %v268 = vadd.s32 %v267, 8
        %v269 = vadd.s32 %v267, 16
        %v270 = vadd.s32 %v267, 24
        %vm271 = vcmp.lt.s32.totalorder %v267, 0
        %v272 = vsub.s32 0, %v267
        %v273 = vsel %vm271, %v272, %v267
        %v274 = vshrl.u32 %v273, 5
        %v275 = vand.u32 %v273, 31
        %v276 = vsub.s32 0, %v275
        %v277 = vsel %vm271, %v276, %v275
        %vm278 = vcmp.lt.s32.totalorder %v268, 0
        %v279 = vsub.s32 0, %v268
        %v280 = vsel %vm278, %v279, %v268
        %v281 = vshrl.u32 %v280, 5
        %v282 = vand.u32 %v280, 31
        %v283 = vsub.s32 0, %v282
        %v284 = vsel %vm278, %v283, %v282
        %vm285 = vcmp.lt.s32.totalorder %v269, 0
        %v286 = vsub.s32 0, %v269
        %v287 = vsel %vm285, %v286, %v269
        %v288 = vshrl.u32 %v287, 5
        %v289 = vand.u32 %v287, 31
        %v290 = vsub.s32 0, %v289
        %v291 = vsel %vm285, %v290, %v289
        %vm292 = vcmp.lt.s32.totalorder %v270, 0
        %v293 = vsub.s32 0, %v270
        %v294 = vsel %vm292, %v293, %v270
        %v295 = vshrl.u32 %v294, 5
        %v296 = vand.u32 %v294, 31
        %v297 = vsub.s32 0, %v296
        %v298 = vsel %vm292, %v297, %v296
        %vm299 = vcmp.ne.s32.totalorder %v277, 0
        %vm300 = vcmp.ne.s32.totalorder %v284, 0
        %vm301 = vcmp.ne.s32.totalorder %v291, 0
        %vm302 = vcmp.ne.s32.totalorder %v298, 0
        %vm303 = vcmp.lt.s32.totalorder %v277, 0
        %vm304 = vcmp.lt.s32.totalorder %v284, 0
        %vm305 = vcmp.lt.s32.totalorder %v291, 0
        %vm306 = vcmp.lt.s32.totalorder %v298, 0
        %vm307 = vmand %vm303, %vm299
        %vm308 = vmand %vm304, %vm300
        %vm309 = vmand %vm305, %vm301
        %vm310 = vmand %vm306, %vm302
        %v311 = vadd.s32 %v277, 32
        %v312 = vadd.s32 %v284, 32
        %v313 = vadd.s32 %v291, 32
        %v314 = vadd.s32 %v298, 32
        %v315 = vsel %vm307, %v311, %v277
        %v316 = vsel %vm308, %v312, %v284
        %v317 = vsel %vm309, %v313, %v291
        %v318 = vsel %vm310, %v314, %v298
        %vm319 = vcmp.lt.s32.totalorder %v315, 16
        %vm320 = vcmp.lt.s32.totalorder %v316, 16
        %vm321 = vcmp.lt.s32.totalorder %v317, 16
        %vm322 = vcmp.lt.s32.totalorder %v318, 16
        %v323 = vld [vmem:[#allocation2] sm:$0x80]
        %v324 = vld [vmem:[#allocation2 + $0x8] sm:$0xff]
        %v325 = vld [vmem:[#allocation2 + $0x10] sm:$0xff]
        %v326 = vld [vmem:[#allocation4] sm:$0xf]
        %v327 = vld [vmem:[#allocation4 + $0x4] sm:$0xf]
        %v328 = vld [vmem:[#allocation4 + $0x8] sm:$0xf]
        %v329 = vld [vmem:[#allocation4 + $0xc] sm:$0xf]
        %v330 = vld [vmem:[#allocation4 + $0x10] sm:$0xf]
        %v331 = vld [vmem:[#allocation4 + $0x14] sm:$0xf]
        %v332 = vld [vmem:[#allocation4 + $0x18] sm:$0xf]
        %v333 = vld [vmem:[#allocation4 + $0x1c] sm:$0xf]
        %v334 = vld [vmem:[#allocation4 + $0x20] sm:$0xf]
        %v335 = vld [vmem:[#allocation4 + $0x24] sm:$0xf]
        %v336 = vld [vmem:[#allocation4 + $0x28] sm:$0xf]
        %v337 = vld [vmem:[#allocation4 + $0x2c] sm:$0xf]
        %v338 = vld [vmem:[#allocation4 + $0x30] sm:$0xf]
        %v339 = vld [vmem:[#allocation4 + $0x34] sm:$0xf]
        %v340 = vld [vmem:[#allocation4 + $0x38] sm:$0xf]
        %v341 = vld [vmem:[#allocation4 + $0x3c] sm:$0xf]
        %s342 = scalar_lea.vmem [#allocation4], 64
        %v343 = vld [vmem:[%s342] sm:$0xf]
        %v344 = vld [vmem:[%s342 + $0x4] sm:$0xf]
        %v345 = vld [vmem:[%s342 + $0x8] sm:$0xf]
        %v346 = vld [vmem:[%s342 + $0xc] sm:$0xf]
        %v347 = vld [vmem:[%s342 + $0x10] sm:$0xf]
        %v348 = vld [vmem:[%s342 + $0x14] sm:$0xf]
        %v349 = vld [vmem:[%s342 + $0x18] sm:$0xf]
        %v350 = vld [vmem:[%s342 + $0x1c] sm:$0xf]
        %v351 = vld [vmem:[%s342 + $0x20] sm:$0xf]
        %v352 = vld [vmem:[%s342 + $0x24] sm:$0xf]
        %v353 = vld [vmem:[%s342 + $0x28] sm:$0xf]
        %v354 = vld [vmem:[%s342 + $0x2c] sm:$0xf]
        %v355 = vld [vmem:[%s342 + $0x30] sm:$0xf]
        %v356 = vld [vmem:[%s342 + $0x34] sm:$0xf]
        %v357 = vld [vmem:[%s342 + $0x38] sm:$0xf]
        %v358 = vld [vmem:[%s342 + $0x3c] sm:$0xf]
        %v375 = vunpack.c.l.b16 %v343
        %v376 = vunpack.c.l.b16 %v344
        %v377 = vunpack.c.l.b16 %v345
        %v378 = vunpack.c.l.b16 %v346
        %v379 = vunpack.c.l.b16 %v347
        %v380 = vunpack.c.l.b16 %v348
        %v381 = vunpack.c.l.b16 %v349
        %v382 = vunpack.c.l.b16 %v350
        %v383 = vunpack.c.l.b16 %v351
        %v384 = vunpack.c.l.b16 %v352
        %v385 = vunpack.c.l.b16 %v353
        %v386 = vunpack.c.l.b16 %v354
        %v387 = vunpack.c.l.b16 %v355
        %v388 = vunpack.c.l.b16 %v356
        %v389 = vunpack.c.l.b16 %v357
        %v390 = vunpack.c.l.b16 %v358
        %v391 = vpack.c.b16 %v376, %v375
        %v392 = vpack.c.b16 %v378, %v377
        %v393 = vpack.c.b16 %v380, %v379
        %v394 = vpack.c.b16 %v382, %v381
        %v395 = vpack.c.b16 %v384, %v383
        %v396 = vpack.c.b16 %v386, %v385
        %v397 = vpack.c.b16 %v388, %v387
        %v398 = vpack.c.b16 %v390, %v389
        %407 = vmatprep.subr.bf16.mxu0 0
        %408 = vmatpush1.bf16.msra.mxu0 %v391
        %409 = vmatprep.subr.bf16.mxu0 0
        %410 = vmatpush1.bf16.msra.mxu0 %v392
        %411 = vmatprep.subr.bf16.mxu0 0
        %412 = vmatpush1.bf16.msra.mxu0 %v393
        %413 = vmatprep.subr.bf16.mxu0 0
        %414 = vmatpush1.bf16.msra.mxu0 %v394
        %415 = vmatprep.subr.bf16.mxu0 0
        %416 = vmatpush1.bf16.msra.mxu0 %v395
        %417 = vmatprep.subr.bf16.mxu0 0
        %418 = vmatpush1.bf16.msra.mxu0 %v396
        %419 = vmatprep.subr.bf16.mxu0 0
        %420 = vmatpush1.bf16.msra.mxu0 %v397
        %421 = vmatprep.subr.bf16.mxu0 0
        %422 = vmatpush1.bf16.msra.mxu0 %v398
        %423 = vmatprep.subr.bf16.mxu0 0
        %424 = vmatpush1.bf16.msra.mxu0 0
        %425 = vmatprep.subr.bf16.mxu0 0
        %426 = vmatpush1.bf16.msra.mxu0 0
        %427 = vmatprep.subr.bf16.mxu0 0
        %428 = vmatpush1.bf16.msra.mxu0 0
        %429 = vmatprep.subr.bf16.mxu0 0
        %430 = vmatpush1.bf16.msra.mxu0 0
        %431 = vmatprep.subr.bf16.mxu0 0
        %432 = vmatpush1.bf16.msra.mxu0 0
        %433 = vmatprep.subr.bf16.mxu0 0
        %434 = vmatpush1.bf16.msra.mxu0 0
        %435 = vmatprep.subr.bf16.mxu0 0
        %436 = vmatpush1.bf16.msra.mxu0 0
        %437 = vmatprep.subr.bf16.mxu0 0
        %438 = vmatpush1.bf16.msra.mxu0 0
        %439 = vmatprep.mubr.bf16.mxu0 0
        %440 = vmatmul.mubr.bf16.gmra.mrb[0].mxu0 %v324
        %v441 = vpop.f32.mrb[0].mxu0
        %v442 = vadd.f32 0.0, %v441
        %v443 = vpop.f32.mrb[0].mxu0
        %v444 = vpop.f32.mrb[0].mxu0
        %v445 = vadd.f32 0.0, %v444
        %v446 = vpop.f32.mrb[0].mxu0
        %447 = vmatprep.mubr.bf16.mxu0 0
        %448 = vmatmul.mubr.bf16.gmra.mrb[0].mxu0 %v325
        %v449 = vpop.f32.mrb[0].mxu0
        %v450 = vadd.f32 0.0, %v449
        %v451 = vpop.f32.mrb[0].mxu0
        %v452 = vpop.f32.mrb[0].mxu0
        %v453 = vadd.f32 0.0, %v452
        %v454 = vpop.f32.mrb[0].mxu0
        %455 = vdwg.mxu0
        %vm456 = vsmask.f32 256
        %v458 = vshrl.u32 %v323, 16
        %v460 = vrot.slane %v458, 7
        %v462 = vshrl.u32 %v324, 16
        %v464 = vrot.slane %v462, 7
        %v465 = vshll.u32 %v324, 16
        %v467 = vor.u32 %v464, %v465
        %v468 = vsel %vm456, %v460, %v467
        %v470 = vshrl.u32 %v325, 16
        %v472 = vrot.slane %v470, 7
        %v473 = vshll.u32 %v325, 16
        %v475 = vor.u32 %v472, %v473
        %v476 = vsel %vm456, %v464, %v475
        %v495 = vunpack.c.l.b16 %v326
        %v496 = vunpack.c.l.b16 %v327
        %v497 = vunpack.c.l.b16 %v328
        %v498 = vunpack.c.l.b16 %v329
        %v499 = vunpack.c.l.b16 %v330
        %v500 = vunpack.c.l.b16 %v331
        %v501 = vunpack.c.l.b16 %v332
        %v502 = vunpack.c.l.b16 %v333
        %v503 = vunpack.c.l.b16 %v334
        %v504 = vunpack.c.l.b16 %v335
        %v505 = vunpack.c.l.b16 %v336
        %v506 = vunpack.c.l.b16 %v337
        %v507 = vunpack.c.l.b16 %v338
        %v508 = vunpack.c.l.b16 %v339
        %v509 = vunpack.c.l.b16 %v340
        %v510 = vunpack.c.l.b16 %v341
        %v511 = vpack.c.b16 %v496, %v495
        %v512 = vpack.c.b16 %v498, %v497
        %v513 = vpack.c.b16 %v500, %v499
        %v514 = vpack.c.b16 %v502, %v501
        %v515 = vpack.c.b16 %v504, %v503
        %v516 = vpack.c.b16 %v506, %v505
        %v517 = vpack.c.b16 %v508, %v507
        %v518 = vpack.c.b16 %v510, %v509
        %527 = vmatprep.subr.bf16.mxu0 0
        %528 = vmatpush1.bf16.msra.mxu0 %v511
        %529 = vmatprep.subr.bf16.mxu0 0
        %530 = vmatpush1.bf16.msra.mxu0 %v512
        %531 = vmatprep.subr.bf16.mxu0 0
        %532 = vmatpush1.bf16.msra.mxu0 %v513
        %533 = vmatprep.subr.bf16.mxu0 0
        %534 = vmatpush1.bf16.msra.mxu0 %v514
        %535 = vmatprep.subr.bf16.mxu0 0
        %536 = vmatpush1.bf16.msra.mxu0 %v515
        %537 = vmatprep.subr.bf16.mxu0 0
        %538 = vmatpush1.bf16.msra.mxu0 %v516
        %539 = vmatprep.subr.bf16.mxu0 0
        %540 = vmatpush1.bf16.msra.mxu0 %v517
        %541 = vmatprep.subr.bf16.mxu0 0
        %542 = vmatpush1.bf16.msra.mxu0 %v518
        %543 = vmatprep.subr.bf16.mxu0 0
        %544 = vmatpush1.bf16.msra.mxu0 0
        %545 = vmatprep.subr.bf16.mxu0 0
        %546 = vmatpush1.bf16.msra.mxu0 0
        %547 = vmatprep.subr.bf16.mxu0 0
        %548 = vmatpush1.bf16.msra.mxu0 0
        %549 = vmatprep.subr.bf16.mxu0 0
        %550 = vmatpush1.bf16.msra.mxu0 0
        %551 = vmatprep.subr.bf16.mxu0 0
        %552 = vmatpush1.bf16.msra.mxu0 0
        %553 = vmatprep.subr.bf16.mxu0 0
        %554 = vmatpush1.bf16.msra.mxu0 0
        %555 = vmatprep.subr.bf16.mxu0 0
        %556 = vmatpush1.bf16.msra.mxu0 0
        %557 = vmatprep.subr.bf16.mxu0 0
        %558 = vmatpush1.bf16.msra.mxu0 0
        %559 = vmatprep.mubr.bf16.mxu0 0
        %560 = vmatmul.mubr.bf16.gmra.mrb[0].mxu0 %v468
        %v561 = vpop.f32.mrb[0].mxu0
        %v562 = vadd.f32 %v442, %v561
        %v563 = vpop.f32.mrb[0].mxu0
        %v564 = vpop.f32.mrb[0].mxu0
        %v565 = vadd.f32 %v445, %v564
        %v566 = vpop.f32.mrb[0].mxu0
        %567 = vmatprep.mubr.bf16.mxu0 0
        %568 = vmatmul.mubr.bf16.gmra.mrb[0].mxu0 %v476
        %v569 = vpop.f32.mrb[0].mxu0
        %v570 = vadd.f32 %v450, %v569
        %v571 = vpop.f32.mrb[0].mxu0
        %v572 = vpop.f32.mrb[0].mxu0
        %v573 = vadd.f32 %v453, %v572
        %v574 = vpop.f32.mrb[0].mxu0
        %575 = vdwg.mxu0
        %v576 = vld [vmem:[#allocation2 + $0x8] sm:$0xff]
        %v577 = vld [vmem:[#allocation2 + $0x10] sm:$0xff]
        %v578 = vld [vmem:[#allocation2 + $0x18] sm:$0x1]
        %s579 = scalar_lea.vmem [#allocation4], 128
        %v580 = vld [vmem:[%s579] sm:$0xf]
        %v581 = vld [vmem:[%s579 + $0x4] sm:$0xf]
        %v582 = vld [vmem:[%s579 + $0x8] sm:$0xf]
        %v583 = vld [vmem:[%s579 + $0xc] sm:$0xf]
        %v584 = vld [vmem:[%s579 + $0x10] sm:$0xf]
        %v585 = vld [vmem:[%s579 + $0x14] sm:$0xf]
        %v586 = vld [vmem:[%s579 + $0x18] sm:$0xf]
        %v587 = vld [vmem:[%s579 + $0x1c] sm:$0xf]
        %v588 = vld [vmem:[%s579 + $0x20] sm:$0xf]
        %v589 = vld [vmem:[%s579 + $0x24] sm:$0xf]
        %v590 = vld [vmem:[%s579 + $0x28] sm:$0xf]
        %v591 = vld [vmem:[%s579 + $0x2c] sm:$0xf]
        %v592 = vld [vmem:[%s579 + $0x30] sm:$0xf]
        %v593 = vld [vmem:[%s579 + $0x34] sm:$0xf]
        %v594 = vld [vmem:[%s579 + $0x38] sm:$0xf]
        %v595 = vld [vmem:[%s579 + $0x3c] sm:$0xf]
        %vm596 = vsmask.f32 7424
        %v598 = vshrl.u32 %v576, 16
        %v600 = vshll.u32 %v576, 16
        %v602 = vrot.slane %v600, 1
        %v603 = vor.u32 %v598, %v602
        %v605 = vshll.u32 %v577, 16
        %v607 = vrot.slane %v605, 1
        %v608 = vsel %vm596, %v603, %v607
        %v609 = vshrl.u32 %v577, 16
        %v611 = vor.u32 %v609, %v607
        %v613 = vshll.u32 %v578, 16
        %v615 = vrot.slane %v613, 1
        %v616 = vsel %vm596, %v611, %v615
        %v635 = vunpack.c.l.b16 %v580
        %v636 = vunpack.c.l.b16 %v581
        %v637 = vunpack.c.l.b16 %v582
        %v638 = vunpack.c.l.b16 %v583
        %v639 = vunpack.c.l.b16 %v584
        %v640 = vunpack.c.l.b16 %v585
        %v641 = vunpack.c.l.b16 %v586
        %v642 = vunpack.c.l.b16 %v587
        %v643 = vunpack.c.l.b16 %v588
        %v644 = vunpack.c.l.b16 %v589
        %v645 = vunpack.c.l.b16 %v590
        %v646 = vunpack.c.l.b16 %v591
        %v647 = vunpack.c.l.b16 %v592
        %v648 = vunpack.c.l.b16 %v593
        %v649 = vunpack.c.l.b16 %v594
        %v650 = vunpack.c.l.b16 %v595
        %v651 = vpack.c.b16 %v636, %v635
        %v652 = vpack.c.b16 %v638, %v637
        %v653 = vpack.c.b16 %v640, %v639
        %v654 = vpack.c.b16 %v642, %v641
        %v655 = vpack.c.b16 %v644, %v643
        %v656 = vpack.c.b16 %v646, %v645
        %v657 = vpack.c.b16 %v648, %v647
        %v658 = vpack.c.b16 %v650, %v649
        %667 = vmatprep.subr.bf16.mxu0 0
        %668 = vmatpush1.bf16.msra.mxu0 %v651
        %669 = vmatprep.subr.bf16.mxu0 0
        %670 = vmatpush1.bf16.msra.mxu0 %v652
        %671 = vmatprep.subr.bf16.mxu0 0
        %672 = vmatpush1.bf16.msra.mxu0 %v653
        %673 = vmatprep.subr.bf16.mxu0 0
        %674 = vmatpush1.bf16.msra.mxu0 %v654
        %675 = vmatprep.subr.bf16.mxu0 0
        %676 = vmatpush1.bf16.msra.mxu0 %v655
        %677 = vmatprep.subr.bf16.mxu0 0
        %678 = vmatpush1.bf16.msra.mxu0 %v656
        %679 = vmatprep.subr.bf16.mxu0 0
        %680 = vmatpush1.bf16.msra.mxu0 %v657
        %681 = vmatprep.subr.bf16.mxu0 0
        %682 = vmatpush1.bf16.msra.mxu0 %v658
        %683 = vmatprep.subr.bf16.mxu0 0
        %684 = vmatpush1.bf16.msra.mxu0 0
        %685 = vmatprep.subr.bf16.mxu0 0
        %686 = vmatpush1.bf16.msra.mxu0 0
        %687 = vmatprep.subr.bf16.mxu0 0
        %688 = vmatpush1.bf16.msra.mxu0 0
        %689 = vmatprep.subr.bf16.mxu0 0
        %690 = vmatpush1.bf16.msra.mxu0 0
        %691 = vmatprep.subr.bf16.mxu0 0
        %692 = vmatpush1.bf16.msra.mxu0 0
        %693 = vmatprep.subr.bf16.mxu0 0
        %694 = vmatpush1.bf16.msra.mxu0 0
        %695 = vmatprep.subr.bf16.mxu0 0
        %696 = vmatpush1.bf16.msra.mxu0 0
        %697 = vmatprep.subr.bf16.mxu0 0
        %698 = vmatpush1.bf16.msra.mxu0 0
        %699 = vmatprep.mubr.bf16.mxu0 0
        %700 = vmatmul.mubr.bf16.gmra.mrb[0].mxu0 %v608
        %v701 = vpop.f32.mrb[0].mxu0
        %v702 = vadd.f32 0.0, %v701
        %v703 = vpop.f32.mrb[0].mxu0
        %v704 = vpop.f32.mrb[0].mxu0
        %v705 = vadd.f32 0.0, %v704
        %v706 = vpop.f32.mrb[0].mxu0
        %707 = vmatprep.mubr.bf16.mxu0 0
        %708 = vmatmul.mubr.bf16.gmra.mrb[0].mxu0 %v616
        %v709 = vpop.f32.mrb[0].mxu0
        %v710 = vadd.f32 0.0, %v709
        %v711 = vpop.f32.mrb[0].mxu0
        %v712 = vpop.f32.mrb[0].mxu0
        %v713 = vadd.f32 0.0, %v712
        %v714 = vpop.f32.mrb[0].mxu0
        %715 = vdwg.mxu0
        %v716 = vadd.f32 %v562, %v702
        %v717 = vadd.f32 %v565, %v705
        %v718 = vadd.f32 %v570, %v710
        %v719 = vadd.f32 %v573, %v713
        %v720 = vld [vmem:[%s2] sm:$0x1]
        %v722 = vlaneseq
        %v723 = vshrl.u32 %v722, 7
        %v724 = vsub.s32 0, %v723
        %v725 = vrot.slane %v720, %v724
        %v727 = vadd.f32 %v716, %v725
        %v728 = vadd.f32 %v717, %v725
        %v729 = vadd.f32 %v718, %v725
        %v730 = vadd.f32 %v719, %v725
        %v731 = vmax.f32 %v727, 0.0
        %v732 = vmax.f32 %v728, 0.0
        %v733 = vmax.f32 %v729, 0.0
        %v734 = vmax.f32 %v730, 0.0
        %v735 = vsel %vm319, 1, 0
        %v736 = vsel %vm320, 1, 0
        %v737 = vsel %vm321, 1, 0
        %v738 = vsel %vm322, 1, 0
        %vm739 = vcmp.eq.s32.totalorder %v735, 1
        %vm740 = vcmp.eq.s32.totalorder %v736, 1
        %vm741 = vcmp.eq.s32.totalorder %v737, 1
        %vm742 = vcmp.eq.s32.totalorder %v738, 1
        %v743 = vsel %vm739, %v731, 0.0
        %v744 = vsel %vm740, %v732, 0.0
        %v745 = vsel %vm741, %v733, 0.0
        %v746 = vsel %vm742, %v734, 0.0
        %v747 = vpack.c.bf16 %v744, %v743
        %v748 = vpack.c.bf16 %v746, %v745
        %749 = vst [vmem:[#allocation3 + $0x8] sm:$0xff] %v747
        %750 = vst [vmem:[#allocation3 + $0x10] sm:$0xff] %v748
        %v751 = vld [vmem:[#allocation3] sm:$0x80]
        %v752 = vld [vmem:[#allocation3 + $0x8] sm:$0xff]
        %v753 = vld [vmem:[#allocation3 + $0x10] sm:$0xff]
        %v754 = vld [vmem:[#allocation7] sm:$0xf]
        %v755 = vld [vmem:[#allocation7 + $0x4] sm:$0xf]
        %v756 = vld [vmem:[#allocation7 + $0x8] sm:$0xf]
        %v757 = vld [vmem:[#allocation7 + $0xc] sm:$0xf]
        %v758 = vld [vmem:[#allocation7 + $0x10] sm:$0xf]
        %v759 = vld [vmem:[#allocation7 + $0x14] sm:$0xf]
        %v760 = vld [vmem:[#allocation7 + $0x18] sm:$0xf]
        %v761 = vld [vmem:[#allocation7 + $0x1c] sm:$0xf]
        %v762 = vld [vmem:[#allocation7 + $0x20] sm:$0xf]
        %v763 = vld [vmem:[#allocation7 + $0x24] sm:$0xf]
        %v764 = vld [vmem:[#allocation7 + $0x28] sm:$0xf]
        %v765 = vld [vmem:[#allocation7 + $0x2c] sm:$0xf]
        %v766 = vld [vmem:[#allocation7 + $0x30] sm:$0xf]
        %v767 = vld [vmem:[#allocation7 + $0x34] sm:$0xf]
        %v768 = vld [vmem:[#allocation7 + $0x38] sm:$0xf]
        %v769 = vld [vmem:[#allocation7 + $0x3c] sm:$0xf]
        %s770 = scalar_lea.vmem [#allocation7], 64
        %v771 = vld [vmem:[%s770] sm:$0xf]
        %v772 = vld [vmem:[%s770 + $0x4] sm:$0xf]
        %v773 = vld [vmem:[%s770 + $0x8] sm:$0xf]
        %v774 = vld [vmem:[%s770 + $0xc] sm:$0xf]
        %v775 = vld [vmem:[%s770 + $0x10] sm:$0xf]
        %v776 = vld [vmem:[%s770 + $0x14] sm:$0xf]
        %v777 = vld [vmem:[%s770 + $0x18] sm:$0xf]
        %v778 = vld [vmem:[%s770 + $0x1c] sm:$0xf]
        %v779 = vld [vmem:[%s770 + $0x20] sm:$0xf]
        %v780 = vld [vmem:[%s770 + $0x24] sm:$0xf]
        %v781 = vld [vmem:[%s770 + $0x28] sm:$0xf]
        %v782 = vld [vmem:[%s770 + $0x2c] sm:$0xf]
        %v783 = vld [vmem:[%s770 + $0x30] sm:$0xf]
        %v784 = vld [vmem:[%s770 + $0x34] sm:$0xf]
        %v785 = vld [vmem:[%s770 + $0x38] sm:$0xf]
        %v786 = vld [vmem:[%s770 + $0x3c] sm:$0xf]
        %v803 = vunpack.c.l.b16 %v771
        %v804 = vunpack.c.l.b16 %v772
        %v805 = vunpack.c.l.b16 %v773
        %v806 = vunpack.c.l.b16 %v774
        %v807 = vunpack.c.l.b16 %v775
        %v808 = vunpack.c.l.b16 %v776
        %v809 = vunpack.c.l.b16 %v777
        %v810 = vunpack.c.l.b16 %v778
        %v811 = vunpack.c.l.b16 %v779
        %v812 = vunpack.c.l.b16 %v780
        %v813 = vunpack.c.l.b16 %v781
        %v814 = vunpack.c.l.b16 %v782
        %v815 = vunpack.c.l.b16 %v783
        %v816 = vunpack.c.l.b16 %v784
        %v817 = vunpack.c.l.b16 %v785
        %v818 = vunpack.c.l.b16 %v786
        %v819 = vpack.c.b16 %v804, %v803
        %v820 = vpack.c.b16 %v806, %v805
        %v821 = vpack.c.b16 %v808, %v807
        %v822 = vpack.c.b16 %v810, %v809
        %v823 = vpack.c.b16 %v812, %v811
        %v824 = vpack.c.b16 %v814, %v813
        %v825 = vpack.c.b16 %v816, %v815
        %v826 = vpack.c.b16 %v818, %v817
        %835 = vmatprep.subr.bf16.mxu0 0
        %836 = vmatpush1.bf16.msra.mxu0 %v819
        %837 = vmatprep.subr.bf16.mxu0 0
        %838 = vmatpush1.bf16.msra.mxu0 %v820
        %839 = vmatprep.subr.bf16.mxu0 0
        %840 = vmatpush1.bf16.msra.mxu0 %v821
        %841 = vmatprep.subr.bf16.mxu0 0
        %842 = vmatpush1.bf16.msra.mxu0 %v822
        %843 = vmatprep.subr.bf16.mxu0 0
        %844 = vmatpush1.bf16.msra.mxu0 %v823
        %845 = vmatprep.subr.bf16.mxu0 0
        %846 = vmatpush1.bf16.msra.mxu0 %v824
        %847 = vmatprep.subr.bf16.mxu0 0
        %848 = vmatpush1.bf16.msra.mxu0 %v825
        %849 = vmatprep.subr.bf16.mxu0 0
        %850 = vmatpush1.bf16.msra.mxu0 %v826
        %851 = vmatprep.subr.bf16.mxu0 0
        %852 = vmatpush1.bf16.msra.mxu0 0
        %853 = vmatprep.subr.bf16.mxu0 0
        %854 = vmatpush1.bf16.msra.mxu0 0
        %855 = vmatprep.subr.bf16.mxu0 0
        %856 = vmatpush1.bf16.msra.mxu0 0
        %857 = vmatprep.subr.bf16.mxu0 0
        %858 = vmatpush1.bf16.msra.mxu0 0
        %859 = vmatprep.subr.bf16.mxu0 0
        %860 = vmatpush1.bf16.msra.mxu0 0
        %861 = vmatprep.subr.bf16.mxu0 0
        %862 = vmatpush1.bf16.msra.mxu0 0
        %863 = vmatprep.subr.bf16.mxu0 0
        %864 = vmatpush1.bf16.msra.mxu0 0
        %865 = vmatprep.subr.bf16.mxu0 0
        %866 = vmatpush1.bf16.msra.mxu0 0
        %867 = vmatprep.mubr.bf16.mxu0 0
        %868 = vmatmul.mubr.bf16.gmra.mrb[0].mxu0 %v752
        %v869 = vpop.f32.mrb[0].mxu0
        %v870 = vadd.f32 0.0, %v869
        %v871 = vpop.f32.mrb[0].mxu0
        %v872 = vpop.f32.mrb[0].mxu0
        %v873 = vadd.f32 0.0, %v872
        %v874 = vpop.f32.mrb[0].mxu0
        %875 = vmatprep.mubr.bf16.mxu0 0
        %876 = vmatmul.mubr.bf16.gmra.mrb[0].mxu0 %v753
        %v877 = vpop.f32.mrb[0].mxu0
        %v878 = vpop.f32.mrb[0].mxu0
        %v879 = vpop.f32.mrb[0].mxu0
        %v880 = vpop.f32.mrb[0].mxu0
        %881 = vdwg.mxu0
        %v883 = vshrl.u32 %v751, 16
        %v885 = vrot.slane %v883, 7
        %v887 = vshrl.u32 %v752, 16
        %v889 = vrot.slane %v887, 7
        %v890 = vshll.u32 %v752, 16
        %v892 = vor.u32 %v889, %v890
        %v893 = vsel %vm456, %v885, %v892
        %v895 = vshrl.u32 %v753, 16
        %v897 = vrot.slane %v895, 7
        %v898 = vshll.u32 %v753, 16
        %v900 = vor.u32 %v897, %v898
        %v901 = vsel %vm456, %v889, %v900
        %v920 = vunpack.c.l.b16 %v754
        %v921 = vunpack.c.l.b16 %v755
        %v922 = vunpack.c.l.b16 %v756
        %v923 = vunpack.c.l.b16 %v757
        %v924 = vunpack.c.l.b16 %v758
        %v925 = vunpack.c.l.b16 %v759
        %v926 = vunpack.c.l.b16 %v760
        %v927 = vunpack.c.l.b16 %v761
        %v928 = vunpack.c.l.b16 %v762
        %v929 = vunpack.c.l.b16 %v763
        %v930 = vunpack.c.l.b16 %v764
        %v931 = vunpack.c.l.b16 %v765
        %v932 = vunpack.c.l.b16 %v766
        %v933 = vunpack.c.l.b16 %v767
        %v934 = vunpack.c.l.b16 %v768
        %v935 = vunpack.c.l.b16 %v769
        %v936 = vpack.c.b16 %v921, %v920
        %v937 = vpack.c.b16 %v923, %v922
        %v938 = vpack.c.b16 %v925, %v924
        %v939 = vpack.c.b16 %v927, %v926
        %v940 = vpack.c.b16 %v929, %v928
        %v941 = vpack.c.b16 %v931, %v930
        %v942 = vpack.c.b16 %v933, %v932
        %v943 = vpack.c.b16 %v935, %v934
        %952 = vmatprep.subr.bf16.mxu0 0
        %953 = vmatpush1.bf16.msra.mxu0 %v936
        %954 = vmatprep.subr.bf16.mxu0 0
        %955 = vmatpush1.bf16.msra.mxu0 %v937
        %956 = vmatprep.subr.bf16.mxu0 0
        %957 = vmatpush1.bf16.msra.mxu0 %v938
        %958 = vmatprep.subr.bf16.mxu0 0
        %959 = vmatpush1.bf16.msra.mxu0 %v939
        %960 = vmatprep.subr.bf16.mxu0 0
        %961 = vmatpush1.bf16.msra.mxu0 %v940
        %962 = vmatprep.subr.bf16.mxu0 0
        %963 = vmatpush1.bf16.msra.mxu0 %v941
        %964 = vmatprep.subr.bf16.mxu0 0
        %965 = vmatpush1.bf16.msra.mxu0 %v942
        %966 = vmatprep.subr.bf16.mxu0 0
        %967 = vmatpush1.bf16.msra.mxu0 %v943
        %968 = vmatprep.subr.bf16.mxu0 0
        %969 = vmatpush1.bf16.msra.mxu0 0
        %970 = vmatprep.subr.bf16.mxu0 0
        %971 = vmatpush1.bf16.msra.mxu0 0
        %972 = vmatprep.subr.bf16.mxu0 0
        %973 = vmatpush1.bf16.msra.mxu0 0
        %974 = vmatprep.subr.bf16.mxu0 0
        %975 = vmatpush1.bf16.msra.mxu0 0
        %976 = vmatprep.subr.bf16.mxu0 0
        %977 = vmatpush1.bf16.msra.mxu0 0
        %978 = vmatprep.subr.bf16.mxu0 0
        %979 = vmatpush1.bf16.msra.mxu0 0
        %980 = vmatprep.subr.bf16.mxu0 0
        %981 = vmatpush1.bf16.msra.mxu0 0
        %982 = vmatprep.subr.bf16.mxu0 0
        %983 = vmatpush1.bf16.msra.mxu0 0
        %984 = vmatprep.mubr.bf16.mxu0 0
        %985 = vmatmul.mubr.bf16.gmra.mrb[0].mxu0 %v893
        %v986 = vpop.f32.mrb[0].mxu0
        %v987 = vadd.f32 %v870, %v986
        %v988 = vpop.f32.mrb[0].mxu0
        %v989 = vpop.f32.mrb[0].mxu0
        %v990 = vadd.f32 %v873, %v989
        %v991 = vpop.f32.mrb[0].mxu0
        %992 = vmatprep.mubr.bf16.mxu0 0
        %993 = vmatmul.mubr.bf16.gmra.mrb[0].mxu0 %v901
        %v994 = vpop.f32.mrb[0].mxu0
        %v995 = vpop.f32.mrb[0].mxu0
        %v996 = vpop.f32.mrb[0].mxu0
        %v997 = vpop.f32.mrb[0].mxu0
        %998 = vdwg.mxu0
        %v999 = vld [vmem:[#allocation3 + $0x8] sm:$0xff]
        %v1000 = vld [vmem:[#allocation3 + $0x10] sm:$0xff]
        %v1001 = vld [vmem:[#allocation3 + $0x18] sm:$0x1]
        %s1002 = scalar_lea.vmem [#allocation7], 128
        %v1003 = vld [vmem:[%s1002] sm:$0xf]
        %v1004 = vld [vmem:[%s1002 + $0x4] sm:$0xf]
        %v1005 = vld [vmem:[%s1002 + $0x8] sm:$0xf]
        %v1006 = vld [vmem:[%s1002 + $0xc] sm:$0xf]
        %v1007 = vld [vmem:[%s1002 + $0x10] sm:$0xf]
        %v1008 = vld [vmem:[%s1002 + $0x14] sm:$0xf]
        %v1009 = vld [vmem:[%s1002 + $0x18] sm:$0xf]
        %v1010 = vld [vmem:[%s1002 + $0x1c] sm:$0xf]
        %v1011 = vld [vmem:[%s1002 + $0x20] sm:$0xf]
        %v1012 = vld [vmem:[%s1002 + $0x24] sm:$0xf]
        %v1013 = vld [vmem:[%s1002 + $0x28] sm:$0xf]
        %v1014 = vld [vmem:[%s1002 + $0x2c] sm:$0xf]
        %v1015 = vld [vmem:[%s1002 + $0x30] sm:$0xf]
        %v1016 = vld [vmem:[%s1002 + $0x34] sm:$0xf]
        %v1017 = vld [vmem:[%s1002 + $0x38] sm:$0xf]
        %v1018 = vld [vmem:[%s1002 + $0x3c] sm:$0xf]
        %v1020 = vshrl.u32 %v999, 16
        %v1022 = vshll.u32 %v999, 16
        %v1024 = vrot.slane %v1022, 1
        %v1025 = vor.u32 %v1020, %v1024
        %v1027 = vshll.u32 %v1000, 16
        %v1029 = vrot.slane %v1027, 1
        %v1030 = vsel %vm596, %v1025, %v1029
        %v1031 = vshrl.u32 %v1000, 16
        %v1033 = vor.u32 %v1031, %v1029
        %v1035 = vshll.u32 %v1001, 16
        %v1037 = vrot.slane %v1035, 1
        %v1038 = vsel %vm596, %v1033, %v1037
        %v1057 = vunpack.c.l.b16 %v1003
        %v1058 = vunpack.c.l.b16 %v1004
        %v1059 = vunpack.c.l.b16 %v1005
        %v1060 = vunpack.c.l.b16 %v1006
        %v1061 = vunpack.c.l.b16 %v1007
        %v1062 = vunpack.c.l.b16 %v1008
        %v1063 = vunpack.c.l.b16 %v1009
        %v1064 = vunpack.c.l.b16 %v1010
        %v1065 = vunpack.c.l.b16 %v1011
        %v1066 = vunpack.c.l.b16 %v1012
        %v1067 = vunpack.c.l.b16 %v1013
        %v1068 = vunpack.c.l.b16 %v1014
        %v1069 = vunpack.c.l.b16 %v1015
        %v1070 = vunpack.c.l.b16 %v1016
        %v1071 = vunpack.c.l.b16 %v1017
        %v1072 = vunpack.c.l.b16 %v1018
        %v1073 = vpack.c.b16 %v1058, %v1057
        %v1074 = vpack.c.b16 %v1060, %v1059
        %v1075 = vpack.c.b16 %v1062, %v1061
        %v1076 = vpack.c.b16 %v1064, %v1063
        %v1077 = vpack.c.b16 %v1066, %v1065
        %v1078 = vpack.c.b16 %v1068, %v1067
        %v1079 = vpack.c.b16 %v1070, %v1069
        %v1080 = vpack.c.b16 %v1072, %v1071
        %1089 = vmatprep.subr.bf16.mxu0 0
        %1090 = vmatpush1.bf16.msra.mxu0 %v1073
        %1091 = vmatprep.subr.bf16.mxu0 0
        %1092 = vmatpush1.bf16.msra.mxu0 %v1074
        %1093 = vmatprep.subr.bf16.mxu0 0
        %1094 = vmatpush1.bf16.msra.mxu0 %v1075
        %1095 = vmatprep.subr.bf16.mxu0 0
        %1096 = vmatpush1.bf16.msra.mxu0 %v1076
        %1097 = vmatprep.subr.bf16.mxu0 0
        %1098 = vmatpush1.bf16.msra.mxu0 %v1077
        %1099 = vmatprep.subr.bf16.mxu0 0
        %1100 = vmatpush1.bf16.msra.mxu0 %v1078
        %1101 = vmatprep.subr.bf16.mxu0 0
        %1102 = vmatpush1.bf16.msra.mxu0 %v1079
        %1103 = vmatprep.subr.bf16.mxu0 0
        %1104 = vmatpush1.bf16.msra.mxu0 %v1080
        %1105 = vmatprep.subr.bf16.mxu0 0
        %1106 = vmatpush1.bf16.msra.mxu0 0
        %1107 = vmatprep.subr.bf16.mxu0 0
        %1108 = vmatpush1.bf16.msra.mxu0 0
        %1109 = vmatprep.subr.bf16.mxu0 0
        %1110 = vmatpush1.bf16.msra.mxu0 0
        %1111 = vmatprep.subr.bf16.mxu0 0
        %1112 = vmatpush1.bf16.msra.mxu0 0
        %1113 = vmatprep.subr.bf16.mxu0 0
        %1114 = vmatpush1.bf16.msra.mxu0 0
        %1115 = vmatprep.subr.bf16.mxu0 0
        %1116 = vmatpush1.bf16.msra.mxu0 0
        %1117 = vmatprep.subr.bf16.mxu0 0
        %1118 = vmatpush1.bf16.msra.mxu0 0
        %1119 = vmatprep.subr.bf16.mxu0 0
        %1120 = vmatpush1.bf16.msra.mxu0 0
        %1121 = vmatprep.mubr.bf16.mxu0 0
        %1122 = vmatmul.mubr.bf16.gmra.mrb[0].mxu0 %v1030
        %v1123 = vpop.f32.mrb[0].mxu0
        %v1124 = vadd.f32 0.0, %v1123
        %v1125 = vpop.f32.mrb[0].mxu0
        %v1126 = vpop.f32.mrb[0].mxu0
        %v1127 = vadd.f32 0.0, %v1126
        %v1128 = vpop.f32.mrb[0].mxu0
        %1129 = vmatprep.mubr.bf16.mxu0 0
        %1130 = vmatmul.mubr.bf16.gmra.mrb[0].mxu0 %v1038
        %v1131 = vpop.f32.mrb[0].mxu0
        %v1132 = vpop.f32.mrb[0].mxu0
        %v1133 = vpop.f32.mrb[0].mxu0
        %v1134 = vpop.f32.mrb[0].mxu0
        %1135 = vdwg.mxu0
        %v1136 = vadd.f32 %v987, %v1124
        %v1137 = vadd.f32 %v990, %v1127
        %v1138 = vld [vmem:[%s4] sm:$0x1]
        %v1140 = vlaneseq
        %v1141 = vshrl.u32 %v1140, 7
        %v1142 = vsub.s32 0, %v1141
        %v1143 = vrot.slane %v1138, %v1142
        %v1145 = vadd.f32 %v1136, %v1143
        %v1146 = vadd.f32 %v1137, %v1143
        %v1147 = vmax.f32 %v1145, 0.0
        %v1148 = vmax.f32 %v1146, 0.0
        %v1149 = vld [vmem:[%s252] sm:$0xff]
        %v1150 = vld [vmem:[%s252 + $0x8] sm:$0xff]
        %v1151 = vsel %vm261, %v1149, 0.0
        %v1152 = vsel %vm261, %v1150, 0.0
        %v1153 = vadd.f32 %v1151, %v1147
        %v1154 = vadd.f32 %v1152, %v1148
        %1155 = vst [vmem:[%s247] sm:$0xff] %v1153
        %1156 = vst [vmem:[%s247 + $0x8] sm:$0xff] %v1154
        %s1157 = sand.u32 %s139, 1
        %s1158 = scalar_lea.sflag [#allocation6], %s1157
        %s1159 = sand.u32 %s139, 1
        %s1160 = smul.addr %s1159, 16
        %s1161 = scalar_lea.vmem [#allocation9], %s1160
        // Predicated region
        $region49: #{tpu_custom_call.1} parent=39 // pred_check
          %p1162 = pneg %p149
        $region50: #{tpu_custom_call.1} parent=39 // pred_check_branch
          %1164 = sbr.rel (%p1162) target = $region52
        $region51: #{tpu_custom_call.1} parent=39 // pred_region
          %s1166 = ssub.s32 256, 256
          %1167 = vsyncadd %s1158, %s1166
          %s1168 = smul.addr %s21, 2
          %s1169 = smul.addr %s1168, 128
          %s1170 = scalar_lea.hbm %s5, %s1169
          %s1171 = sshll.u32 %s1161, 4
          %s1172 = int_to_ptr.vmem [resolvable:$true] %s1171
          %1177 = dma.vmem_to_hbm [thread:$0]  %s1172, 256, %s1170, %s1158, 128, 128, 8
        $region52: #{tpu_custom_call.1} parent=39 // pred_fallthru
          _
      $region40: #{tpu_custom_call.1} parent=5 // pred_fallthru
        _
      %p1178 = scmp.le.s32.totalorder 2, %s16
      // Predicated region
      $region53: #{tpu_custom_call.1} parent=5 // pred_check
        %p1179 = pneg %p1178
      $region54: #{tpu_custom_call.1} parent=5 // pred_check_branch
        %1181 = sbr.rel (%p1179) target = $region56
      $region55: #{tpu_custom_call.1} parent=5 // pred_region
        %s1182 = ssub.s32 %s16, 2
        // Predicated region
        $region57: #{tpu_custom_call.1} parent=55 // pred_check
          %p1183 = pneg %p155
        $region58: #{tpu_custom_call.1} parent=55 // pred_check_branch
          %1185 = sbr.rel (%p1183) target = $region60
        $region59: #{tpu_custom_call.1} parent=55 // pred_region
          %s1186 = sand.u32 %s140, 1
          %s1187 = scalar_lea.sflag [#allocation6], %s1186
          %s1188 = sand.u32 %s140, 1
          %s1189 = smul.addr %s1188, 16
          %s1190 = scalar_lea.vmem [#allocation9], %s1189
          %1191 = dma.done %s1187, 256
        $region60: #{tpu_custom_call.1} parent=55 // pred_fallthru
          _
      $region56: #{tpu_custom_call.1} parent=5 // pred_fallthru
        _
    $region6: #{tpu_custom_call.1} parent=1 // loop_footer
      %s20 = sadd.s32 1, %s16
    $region7: #{tpu_custom_call.1} parent=1 // loop_footer_branch
      %15 = sbr.rel target = $region3
    $region8: #{tpu_custom_call.1} parent=1 // loop_exit
      _
    %1192 = vsyncpa [#allocation5], 1
    %s1193 = scalar_lea.sflag [#allocation5], 1
    %1194 = vsyncpa %s1193, 1
    %1195 = vsyncpa [#allocation8], 1
    %1196 = vsyncpa [#allocation6], 1
    %s1197 = scalar_lea.sflag [#allocation6], 1
    %1198 = vsyncpa %s1197, 1

</llo_original>
